<compile_context>
chip_gen: v7x
topology: tpu7x:2x2x1
jax: 0.10.0
libtpu: 0.0.40
codegen_flags: <defaults>
</compile_context>

<pallas_src>
import jax
import jax.numpy as jnp
from jax.experimental import pallas as pl
from jax.experimental.pallas import tpu as pltpu

LANE = 128
SUBLANE = 8
TILE_ROWS_MAX = 512          # (512, 128) f32 = 256 KiB per array per block
D_SCALE = 1.702              # classical IRT scaling constant


def _make_irt_kernel(value_range, a_range):
    """Build the elementwise 3PL-IRT kernel with the ranges baked in (static)."""

    def kernel(x_ref, out_ref):
        # x_ref block: (4, tile_r, 128) = [theta, a, b, c] stacked.
        theta = x_ref[0]
        a = x_ref[1]
        b = x_ref[2]
        c = jax.nn.sigmoid(x_ref[3])

        if value_range:
            theta = value_range * (jax.nn.sigmoid(theta) - 0.5)
            b = value_range * (jax.nn.sigmoid(b) - 0.5)
        if a_range:
            a = a_range * jax.nn.sigmoid(a)
        else:
            a = jax.nn.softplus(a)

        # 3PL item response function. sigmoid form: single EUP transcendental,
        # no divide, no exp overflow.
        out_ref[...] = c + (1.0 - c) * jax.nn.sigmoid(D_SCALE * a * (theta - b))

    return kernel


def init_irtnet_params(key, nuser, nitem):
    """Deterministic N(0,1) init matching nn.Embedding defaults."""
    k_a, k_b, k_c, k_t = jax.random.split(key, 4)
    return {
        "a": jax.random.normal(k_a, (nitem, 1), jnp.float32),
        "b": jax.random.normal(k_b, (nitem, 1), jnp.float32),
        "c": jax.random.normal(k_c, (nitem, 1), jnp.float32),
        "theta": jax.random.normal(k_t, (nuser, 1), jnp.float32),
    }


def irtnet_forward(params, user, item, *, value_range, a_range, mode="irt",
                   check_nan=False):
    """Gather (glue, plain JAX) + tiled Pallas elementwise IRT hot path."""
    del mode  # mode only routes to the same irf in the reference; D fixed above.

    # Embedding lookups + squeeze(-1) (glue; XLA fuses gather + pad + stack).
    # TODO(synk): fuse the gather into the kernel (scalar-prefetch / DMA gather)
    # to remove the intermediate HBM round trip at very large batch sizes.
    theta = params["theta"][user, 0].astype(jnp.float32)
    a = params["a"][item, 0].astype(jnp.float32)
    b = params["b"][item, 0].astype(jnp.float32)
    c = params["c"][item, 0].astype(jnp.float32)

    if check_nan:
        # Eager-only convenience check (forces a host sync; do NOT enable
        # inside jax.jit). Sigmoid maps NaN->NaN, so raw gathers suffice.
        if bool(jnp.any(jnp.isnan(theta)) | jnp.any(jnp.isnan(a)) | jnp.any(jnp.isnan(b))):
            raise ValueError(
                "ValueError:theta,a,b may contains nan!  The value_range or a_range is too large."
            )

    batch = user.shape[0]

    # Sublane-dense layout: pad to (rows, 128) with rows a multiple of 8,
    # then tile rows over a 1-D parallel grid.
    rows = max(SUBLANE, -(-batch // LANE))            # ceil(batch/128), >= 8
    rows = -(-rows // SUBLANE) * SUBLANE              # round up to multiple of 8
    tile_r = min(rows, TILE_ROWS_MAX)
    rows = -(-rows // tile_r) * tile_r                # round up to multiple of tile_r
    n_blocks = rows // tile_r
    pad = rows * LANE - batch

    def prep(x):
        return jnp.pad(x, (0, pad)).reshape(rows, LANE)

    # Single stacked input -> one DMA stream per block.
    x = jnp.stack([prep(theta), prep(a), prep(b), prep(c)], axis=0)  # (4, rows, 128)

    kernel = _make_irt_kernel(value_range, a_range)

    out = pl.pallas_call(
        kernel,
        out_shape=jax.ShapeDtypeStruct((rows, LANE), jnp.float32),
        grid=(n_blocks,),
        in_specs=[pl.BlockSpec((4, tile_r, LANE), lambda i: (0, i, 0))],
        out_specs=pl.BlockSpec((tile_r, LANE), lambda i: (i, 0)),
        compiler_params=pltpu.CompilerParams(
            dimension_semantics=("parallel",),      # v7x: shard tiles over 2 TCs
            vmem_limit_bytes=32 * 1024 * 1024,      # sized for v7x (64 MiB phys)
        ),
    )(x)

    return out.reshape(-1)[:batch]


def irtnet_forward_ref(params, user, item, *, value_range, a_range):
    """Pure-JAX reference for correctness checking."""
    theta = params["theta"][user, 0]
    a = params["a"][item, 0]
    b = params["b"][item, 0]
    c = jax.nn.sigmoid(params["c"][item, 0])
    if value_range:
        theta = value_range * (jax.nn.sigmoid(theta) - 0.5)
        b = value_range * (jax.nn.sigmoid(b) - 0.5)
    if a_range:
        a = a_range * jax.nn.sigmoid(a)
    else:
        a = jax.nn.softplus(a)
    return c + (1.0 - c) / (1.0 + jnp.exp(-D_SCALE * a * (theta - b)))


if __name__ == "__main__":
    nuser, nitem, batch = 32, 16, 8
    value_range, a_range = 4.0, 3.0

    key = jax.random.PRNGKey(0)
    k_params, k_u, k_i = jax.random.split(key, 3)
    params = init_irtnet_params(k_params, nuser, nitem)

    user = jax.random.randint(k_u, (batch,), 0, nuser, dtype=jnp.int32)
    item = jax.random.randint(k_i, (batch,), 0, nitem, dtype=jnp.int32)

    out = irtnet_forward(params, user, item, value_range=value_range, a_range=a_range)
    out = jax.block_until_ready(out)

    ref = irtnet_forward_ref(params, user, item, value_range=value_range, a_range=a_range)
    assert out.shape == (batch,)
    assert jnp.allclose(out, ref, atol=1e-5, rtol=1e-5)

    print("KERNEL_OK")
</pallas_src>

<mosaic_0001>
module attributes {stable_mosaic.version = 11 : i64} {
  func.func @kernel(%arg0: i32, %arg1: memref<4x8x128xf32, #tpu.memory_space<vmem>>, %arg2: memref<8x128xf32, #tpu.memory_space<vmem>>) attributes {dimension_semantics = [#tpu.dimension_semantics<parallel>], iteration_bounds = array<i64: 1>, scalar_prefetch = 0 : i64, scratch_operands = 0 : i64, tpu.core_type = #tpu.core_type<tc>, window_params = [{transform_indices = @transform_0, window_bounds = array<i64: 4, 8, 128>}, {transform_indices = @transform_1, window_bounds = array<i64: 8, 128>}]} {
    %c0 = arith.constant 0 : index
    %c0_0 = arith.constant 0 : index
    %c0_1 = arith.constant 0 : index
    %0 = vector.load %arg1[%c0, %c0_0, %c0_1] : memref<4x8x128xf32, #tpu.memory_space<vmem>>, vector<1x8x128xf32>
    %1 = vector.shape_cast %0 : vector<1x8x128xf32> to vector<8x128xf32>
    %c1 = arith.constant 1 : index
    %c0_2 = arith.constant 0 : index
    %c0_3 = arith.constant 0 : index
    %2 = vector.load %arg1[%c1, %c0_2, %c0_3] : memref<4x8x128xf32, #tpu.memory_space<vmem>>, vector<1x8x128xf32>
    %3 = vector.shape_cast %2 : vector<1x8x128xf32> to vector<8x128xf32>
    %c2 = arith.constant 2 : index
    %c0_4 = arith.constant 0 : index
    %c0_5 = arith.constant 0 : index
    %4 = vector.load %arg1[%c2, %c0_4, %c0_5] : memref<4x8x128xf32, #tpu.memory_space<vmem>>, vector<1x8x128xf32>
    %5 = vector.shape_cast %4 : vector<1x8x128xf32> to vector<8x128xf32>
    %c3 = arith.constant 3 : index
    %c0_6 = arith.constant 0 : index
    %c0_7 = arith.constant 0 : index
    %6 = vector.load %arg1[%c3, %c0_6, %c0_7] : memref<4x8x128xf32, #tpu.memory_space<vmem>>, vector<1x8x128xf32>
    %7 = vector.shape_cast %6 : vector<1x8x128xf32> to vector<8x128xf32>
    %8 = arith.negf %7 : vector<8x128xf32>
    %9 = math.exp %8 : vector<8x128xf32>
    %cst = arith.constant 1.000000e+00 : f32
    %10 = vector.broadcast %cst : f32 to vector<8x128xf32>
    %11 = arith.addf %10, %9 : vector<8x128xf32>
    %12 = arith.divf %10, %11 : vector<8x128xf32>
    %13 = arith.negf %1 : vector<8x128xf32>
    %14 = math.exp %13 : vector<8x128xf32>
    %cst_8 = arith.constant 1.000000e+00 : f32
    %15 = vector.broadcast %cst_8 : f32 to vector<8x128xf32>
    %16 = arith.addf %15, %14 : vector<8x128xf32>
    %17 = arith.divf %15, %16 : vector<8x128xf32>
    %cst_9 = arith.constant 5.000000e-01 : f32
    %18 = vector.broadcast %cst_9 : f32 to vector<8x128xf32>
    %19 = arith.subf %17, %18 : vector<8x128xf32>
    %cst_10 = arith.constant 4.000000e+00 : f32
    %20 = vector.broadcast %cst_10 : f32 to vector<8x128xf32>
    %21 = arith.mulf %20, %19 : vector<8x128xf32>
    %22 = arith.negf %5 : vector<8x128xf32>
    %23 = math.exp %22 : vector<8x128xf32>
    %cst_11 = arith.constant 1.000000e+00 : f32
    %24 = vector.broadcast %cst_11 : f32 to vector<8x128xf32>
    %25 = arith.addf %24, %23 : vector<8x128xf32>
    %26 = arith.divf %24, %25 : vector<8x128xf32>
    %cst_12 = arith.constant 5.000000e-01 : f32
    %27 = vector.broadcast %cst_12 : f32 to vector<8x128xf32>
    %28 = arith.subf %26, %27 : vector<8x128xf32>
    %cst_13 = arith.constant 4.000000e+00 : f32
    %29 = vector.broadcast %cst_13 : f32 to vector<8x128xf32>
    %30 = arith.mulf %29, %28 : vector<8x128xf32>
    %31 = arith.negf %3 : vector<8x128xf32>
    %32 = math.exp %31 : vector<8x128xf32>
    %cst_14 = arith.constant 1.000000e+00 : f32
    %33 = vector.broadcast %cst_14 : f32 to vector<8x128xf32>
    %34 = arith.addf %33, %32 : vector<8x128xf32>
    %35 = arith.divf %33, %34 : vector<8x128xf32>
    %cst_15 = arith.constant 3.000000e+00 : f32
    %36 = vector.broadcast %cst_15 : f32 to vector<8x128xf32>
    %37 = arith.mulf %36, %35 : vector<8x128xf32>
    %cst_16 = arith.constant 1.000000e+00 : f32
    %38 = vector.broadcast %cst_16 : f32 to vector<8x128xf32>
    %39 = arith.subf %38, %12 : vector<8x128xf32>
    %cst_17 = arith.constant 1.702000e+00 : f32
    %40 = vector.broadcast %cst_17 : f32 to vector<8x128xf32>
    %41 = arith.mulf %40, %37 : vector<8x128xf32>
    %42 = arith.subf %21, %30 : vector<8x128xf32>
    %43 = arith.mulf %41, %42 : vector<8x128xf32>
    %44 = arith.negf %43 : vector<8x128xf32>
    %45 = math.exp %44 : vector<8x128xf32>
    %cst_18 = arith.constant 1.000000e+00 : f32
    %46 = vector.broadcast %cst_18 : f32 to vector<8x128xf32>
    %47 = arith.addf %46, %45 : vector<8x128xf32>
    %48 = arith.divf %46, %47 : vector<8x128xf32>
    %49 = arith.mulf %39, %48 : vector<8x128xf32>
    %50 = arith.addf %12, %49 : vector<8x128xf32>
    %c0_19 = arith.constant 0 : index
    %c0_20 = arith.constant 0 : index
    %51 = vector.load %arg2[%c0_19, %c0_20] : memref<8x128xf32, #tpu.memory_space<vmem>>, vector<8x128xf32>
    tpu.vector_store %arg2[%c0_19, %c0_20], %50 {strides = array<i32>} : memref<8x128xf32, #tpu.memory_space<vmem>>, vector<8x128xf32>,
    return
  }
  func.func @transform_0(%arg0: i32) -> (i32, i32, i32) {
    %c0_i32 = arith.constant 0 : i32
    %c0_i32_0 = arith.constant 0 : i32
    %c0_i32_1 = arith.constant 0 : i32
    return %c0_i32, %arg0, %c0_i32_0 : i32, i32, i32
  }
  func.func @transform_1(%arg0: i32) -> (i32, i32) {
    %c0_i32 = arith.constant 0 : i32
    %c0_i32_0 = arith.constant 0 : i32
    return %arg0, %c0_i32 : i32, i32
  }
}

</mosaic_0001>

<llo_original>
// kernel: tpu_custom_call.1
$region0: #{tpu_custom_call.1}
  #allocation0 [shape = 'u32[]', space=smem, size = 0x4, offset = 0x4, fixed_abs, tag = 'smem constant byte address 0x4 - core index']
  #allocation1 [shape = 'u32[144,128]{1,0:T(1,128)}', space=vmem, size = 0x12000, scoped, tag = 'internal scratch']
  %s0 = inlined_call_operand.hbm [shape: f32[4,8,128], index: 0, kind: input, shape index: {}]
  %s1 = inlined_call_operand.hbm [shape: f32[8,128], index: 1, kind: output, shape index: {}]
  %s2 = sld [smem:[#allocation0]]
  $region18: #{tpu_custom_call.1} parent=0
    _
  %s4 = ssub.s32 1, %s2
  %s5 = scalar_select 0, %s4, %s2
  $region1: #{tpu_custom_call.1} parent=0
    #allocation2 [shape = 'u8[16384]{0}', space=vmem, size = 0x4000, scoped, tag = 'input window, operand 0, single buffered']
    #allocation3 [shape = 's32[1]{0}', space=sflag, size = 0x4, scoped, tag = 'scoped memory for tpu_custom_call.1']
    #allocation4 [shape = 's32[1]{0}', space=sflag, size = 0x4, scoped, tag = 'scoped memory for tpu_custom_call.1']
    #allocation5 [shape = 'u8[4096]{0}', space=vmem, size = 0x1000, scoped, tag = 'output window, operand 0, single buffered']
    %6 = vsyncpa [#allocation3], 0
    %7 = vsyncpa [#allocation4], 0
    // Predicated region
    $region2: #{tpu_custom_call.1} parent=1 // pred_check
      _
    $region3: #{tpu_custom_call.1} parent=1 // pred_check_branch
      %9 = sbr.rel (0) target = $region5
    $region4: #{tpu_custom_call.1} parent=1 // pred_region
      %s11 = ssub.s32 512, 512
      %12 = vsyncadd [#allocation3], %s11
      %s13 = sshll.u32 [#allocation2], 4
      %s14 = int_to_ptr.vmem [resolvable:$true] %s13
      %19 = dma.hbm_to_vmem [thread:$0]  %s0, 512, %s14, [#allocation3], 128, 128, 8
    $region5: #{tpu_custom_call.1} parent=1 // pred_fallthru
      _
    // Predicated region
    $region6: #{tpu_custom_call.1} parent=1 // pred_check
      _
    $region7: #{tpu_custom_call.1} parent=1 // pred_check_branch
      %21 = sbr.rel (0) target = $region9
    $region8: #{tpu_custom_call.1} parent=1 // pred_region
      %22 = dma.done [#allocation3], 512
    $region9: #{tpu_custom_call.1} parent=1 // pred_fallthru
      _
    %v23 = vld [vmem:[#allocation2] sm:$0xff]
    %s24 = scalar_lea.vmem [#allocation2], 8
    %v25 = vld [vmem:[%s24] sm:$0xff]
    %s26 = scalar_lea.vmem [#allocation2], 16
    %v27 = vld [vmem:[%s26] sm:$0xff]
    %s28 = scalar_lea.vmem [#allocation2], 24
    %v29 = vld [vmem:[%s28] sm:$0xff]
    %v30 = vxor.u32 %v29, 2147483648
    %v31 = vmul.f32 %v30, 1.442695
    %v32 = vpow.pop %v31
    %v33 = vadd.f32 %v32, 1.0
    %v34 = vrcp.pop %v33
    %v35 = vmul.f32 1.0, %v34
    %v36 = vxor.u32 %v23, 2147483648
    %v37 = vmul.f32 %v36, 1.442695
    %v38 = vpow.pop %v37
    %v39 = vadd.f32 %v38, 1.0
    %v40 = vrcp.pop %v39
    %v41 = vmul.f32 1.0, %v40
    %v42 = vsub.f32 %v41, 0.5
    %v43 = vmul.f32 %v42, 4.0
    %v44 = vxor.u32 %v27, 2147483648
    %v45 = vmul.f32 %v44, 1.442695
    %v46 = vpow.pop %v45
    %v47 = vadd.f32 %v46, 1.0
    %v48 = vrcp.pop %v47
    %v49 = vmul.f32 1.0, %v48
    %v50 = vsub.f32 %v49, 0.5
    %v51 = vmul.f32 %v50, 4.0
    %v52 = vxor.u32 %v25, 2147483648
    %v53 = vmul.f32 %v52, 1.442695
    %v54 = vpow.pop %v53
    %v55 = vadd.f32 %v54, 1.0
    %v56 = vrcp.pop %v55
    %v57 = vmul.f32 1.0, %v56
    %v58 = vmul.f32 %v57, 3.0
    %v59 = vsub.f32 1.0, %v35
    %v60 = vmul.f32 %v58, 1.702
    %v61 = vsub.f32 %v43, %v51
    %v62 = vmul.f32 %v60, %v61
    %v63 = vxor.u32 %v62, 2147483648
    %v64 = vmul.f32 %v63, 1.442695
    %v65 = vpow.pop %v64
    %v66 = vadd.f32 %v65, 1.0
    %v67 = vrcp.pop %v66
    %v68 = vmul.f32 1.0, %v67
    %v69 = vmul.f32 %v59, %v68
    %v70 = vadd.f32 %v35, %v69
    %71 = vst [vmem:[#allocation5] sm:$0xff] %v70
    // Predicated region
    $region10: #{tpu_custom_call.1} parent=1 // pred_check
      _
    $region11: #{tpu_custom_call.1} parent=1 // pred_check_branch
      %73 = sbr.rel (0) target = $region13
    $region12: #{tpu_custom_call.1} parent=1 // pred_region
      %s75 = ssub.s32 128, 128
      %76 = vsyncadd [#allocation4], %s75
      %s78 = sshll.u32 [#allocation5], 4
      %s79 = int_to_ptr.vmem [resolvable:$true] %s78
      %81 = dma.vmem_to_hbm [thread:$0]  %s79, 128, %s1, [#allocation4]
    $region13: #{tpu_custom_call.1} parent=1 // pred_fallthru
      _
    // Predicated region
    $region14: #{tpu_custom_call.1} parent=1 // pred_check
      _
    $region15: #{tpu_custom_call.1} parent=1 // pred_check_branch
      %83 = sbr.rel (0) target = $region17
    $region16: #{tpu_custom_call.1} parent=1 // pred_region
      %84 = dma.done [#allocation4], 128
    $region17: #{tpu_custom_call.1} parent=1 // pred_fallthru
      _
    %85 = vsyncpa [#allocation3], 1
    %86 = vsyncpa [#allocation4], 1

</llo_original>
